<compile_context>
chip_gen: v7x
topology: tpu7x:2x2x1
jax: 0.10.0
libtpu: 0.0.40
codegen_flags: <defaults>
</compile_context>

<pallas_src>
import functools

import jax
import jax.numpy as jnp
from jax.experimental import pallas as pl
from jax.experimental.pallas import tpu as pltpu


LANE = 128  # lane width: fc3 outputs are padded to a multiple of this


# ----------------------------------------------------------------------------
# Pallas kernel: both branches of the MLP, fully fused.
#   branch(x_base, x_expert) =
#       fc3( relu( fc2( relu( fc1([x_base, x_expert]) ) ) ) )
# with BN already folded into fc1/fc2 and fc1 split along K for concat fusion.
# ----------------------------------------------------------------------------
def fused_dual_mlp_kernel(
        # activations
        col_base_ref, col_exp_ref, sem_base_ref, sem_exp_ref,
        # color-branch params (BN folded, fc1 split, fc3 lane-padded)
        cw1a_ref, cw1b_ref, cb1_ref, cw2_ref, cb2_ref, cw3_ref, cb3_ref,
        # semantics-branch params
        sw1a_ref, sw1b_ref, sb1_ref, sw2_ref, sb2_ref, sw3_ref, sb3_ref,
        # outputs (lane-dense, padded to 128 columns)
        col_out_ref, sem_out_ref):

    def branch(xb, xe, w1a, w1b, b1, w2, b2, w3, b3):
        # fc1 (+ folded BN) as split-K over the two concat halves; bf16 MXU,
        # f32 accumulation; ReLU epilogue in f32.  Dropout -> identity (eval).
        h = (jnp.dot(xb.astype(jnp.bfloat16), w1a,
                     preferred_element_type=jnp.float32)
             + jnp.dot(xe.astype(jnp.bfloat16), w1b,
                       preferred_element_type=jnp.float32)
             + b1)
        h = jnp.maximum(h, 0.0)

        # fc2 (+ folded BN) + ReLU
        h = jnp.dot(h.astype(jnp.bfloat16), w2,
                    preferred_element_type=jnp.float32) + b2
        h = jnp.maximum(h, 0.0)

        # fc3 (lane-padded to 128 output columns, no activation)
        return jnp.dot(h.astype(jnp.bfloat16), w3,
                       preferred_element_type=jnp.float32) + b3

    col_out_ref[...] = branch(
        col_base_ref[...], col_exp_ref[...],
        cw1a_ref[...], cw1b_ref[...], cb1_ref[...],
        cw2_ref[...], cb2_ref[...],
        cw3_ref[...], cb3_ref[...]).astype(col_out_ref.dtype)

    sem_out_ref[...] = branch(
        sem_base_ref[...], sem_exp_ref[...],
        sw1a_ref[...], sw1b_ref[...], sb1_ref[...],
        sw2_ref[...], sb2_ref[...],
        sw3_ref[...], sb3_ref[...]).astype(sem_out_ref.dtype)


def fused_dual_mlp(col_base, col_exp, sem_base, sem_exp, cparams, sparams):
    """Single pallas_call covering both branches. Inputs are 2D [rows, feat]."""
    Mc = col_base.shape[0]
    Ms = sem_base.shape[0]
    Ncp = cparams["w3"].shape[1]   # lane-padded output width (>= num_bins)
    Nsp = sparams["w3"].shape[1]   # lane-padded output width (>= num_classes)
    vmem = pl.BlockSpec(memory_space=pltpu.MemorySpace.VMEM)
    return pl.pallas_call(
        fused_dual_mlp_kernel,
        out_shape=(jax.ShapeDtypeStruct((Mc, Ncp), jnp.float32),
                   jax.ShapeDtypeStruct((Ms, Nsp), jnp.float32)),
        in_specs=[vmem] * 18,
        out_specs=(vmem, vmem),
    )(col_base, col_exp, sem_base, sem_exp,
      cparams["w1a"], cparams["w1b"], cparams["b1"],
      cparams["w2"], cparams["b2"], cparams["w3"], cparams["b3"],
      sparams["w1a"], sparams["w1b"], sparams["b1"],
      sparams["w2"], sparams["b2"], sparams["w3"], sparams["b3"])


# ----------------------------------------------------------------------------
# Parameter construction (deterministic, synthetic).
#   * PyTorch Linear stores weight as (out, in); we keep (in, out).
#   * BatchNorm1d (eval) is folded into the preceding Linear:
#         BN(xW + b) = x (W * s) + (b * s + t),   s = gamma/sqrt(var+eps),
#                                                 t = beta - mean*s
#   * fc1 is split along K into the [base | expert] halves (concat fusion).
#   * fc3 is zero-padded to a 128-wide lane block (lane-dense stores); the
#     padded columns have zero weight AND zero bias and are sliced off later.
#   * Matmul operands stored in bf16; biases stay f32.
# ----------------------------------------------------------------------------
def _linear_params(key, fan_in, fan_out):
    kw, kb = jax.random.split(key)
    bound = 1.0 / jnp.sqrt(fan_in)
    w = jax.random.uniform(kw, (fan_in, fan_out), jnp.float32, -bound, bound)
    b = jax.random.uniform(kb, (1, fan_out), jnp.float32, -bound, bound)
    return w, b


def _bn_folded(key, feat, eps=1e-5):
    kg, kb, km, kv = jax.random.split(key, 4)
    gamma = 1.0 + 0.1 * jax.random.normal(kg, (1, feat), jnp.float32)
    beta = 0.1 * jax.random.normal(kb, (1, feat), jnp.float32)
    mean = 0.1 * jax.random.normal(km, (1, feat), jnp.float32)
    var = jax.random.uniform(kv, (1, feat), jnp.float32, 0.5, 1.5)
    scale = gamma * jax.lax.rsqrt(var + eps)
    shift = beta - mean * scale
    return scale, shift


def make_branch_params(key, feat):
    """One branch: Linear(2F,F)-BN-Drop-Linear(F,F)-BN-Drop-Linear(F,F)."""
    keys = jax.random.split(key, 5)
    w1, b1 = _linear_params(keys[0], 2 * feat, feat)
    s1, t1 = _bn_folded(keys[1], feat)
    w2, b2 = _linear_params(keys[2], feat, feat)
    s2, t2 = _bn_folded(keys[3], feat)
    w3, b3 = _linear_params(keys[4], feat, feat)

    # Fold BN scale/shift into the Linear weights/biases (eval-mode BN).
    w1f = w1 * s1                  # (2F, F) * (1, F): per-output-column scale
    b1f = b1 * s1 + t1
    w2f = w2 * s2
    b2f = b2 * s2 + t2

    # Split fc1 along K for the fused concat: x_base @ w1a + x_expert @ w1b.
    w1a, w1b = w1f[:feat], w1f[feat:]

    # Lane-pad fc3 to a multiple of 128 output columns (zero weights, zero bias).
    n_pad = ((feat + LANE - 1) // LANE) * LANE
    w3p = jnp.pad(w3, ((0, 0), (0, n_pad - feat)))
    b3p = jnp.pad(b3, ((0, 0), (0, n_pad - feat)))

    bf16 = jnp.bfloat16
    return dict(
        w1a=w1a.astype(bf16), w1b=w1b.astype(bf16), b1=b1f,
        w2=w2f.astype(bf16), b2=b2f,
        w3=w3p.astype(bf16), b3=b3p)


# ----------------------------------------------------------------------------
# Full forward pass (glue reshapes/slices in plain JAX; hot path in the kernel)
# ----------------------------------------------------------------------------
@functools.partial(jax.jit, static_argnames=())
def semantics_color_forward(preds_semantics_base, preds_semantics_expert,
                            preds_color_base, preds_color_expert,
                            color_params, sem_params):
    samples, channels, num_bins = preds_color_base.shape
    num_classes = preds_semantics_base.shape[-1]

    # Flatten (S, C, F) -> (S*C, F) exactly like the PyTorch .view(); the
    # concat itself happens inside the kernel (split-K fc1).
    col_base_flat = preds_color_base.reshape(samples * channels, num_bins)
    col_exp_flat = preds_color_expert.reshape(samples * channels, num_bins)

    col_out_p, sem_out_p = fused_dual_mlp(
        col_base_flat, col_exp_flat,
        preds_semantics_base, preds_semantics_expert,
        color_params, sem_params)

    # Drop the zero lane-padding and restore the (S, C, num_bins) view.
    color_out = col_out_p[:, :num_bins].reshape(samples, channels, num_bins)
    sem_out = sem_out_p[:, :num_classes]
    return sem_out, color_out


if __name__ == "__main__":
    num_bins = 32
    num_classes = 16
    samples = 2
    channels = 4

    root = jax.random.PRNGKey(0)
    k_cparams, k_sparams, k1, k2, k3, k4 = jax.random.split(root, 6)

    color_params = make_branch_params(k_cparams, num_bins)
    sem_params = make_branch_params(k_sparams, num_classes)

    preds_semantics_base = jax.random.normal(k1, (samples, num_classes), jnp.float32)
    preds_semantics_expert = jax.random.normal(k2, (samples, num_classes), jnp.float32)
    preds_color_base = jax.random.normal(k3, (samples, channels, num_bins), jnp.float32)
    preds_color_expert = jax.random.normal(k4, (samples, channels, num_bins), jnp.float32)

    sem_out, color_out = semantics_color_forward(
        preds_semantics_base, preds_semantics_expert,
        preds_color_base, preds_color_expert,
        color_params, sem_params)
    jax.block_until_ready((sem_out, color_out))

    assert sem_out.shape == (samples, num_classes)
    assert color_out.shape == (samples, channels, num_bins)
    assert jnp.all(jnp.isfinite(sem_out)) and jnp.all(jnp.isfinite(color_out))
    print("KERNEL_OK")
</pallas_src>

<mosaic_0001>
module attributes {stable_mosaic.version = 11 : i64} {
  func.func @fused_dual_mlp_kernel(%arg0: memref<8x32xf32, #tpu.memory_space<vmem>>, %arg1: memref<8x32xf32, #tpu.memory_space<vmem>>, %arg2: memref<2x16xf32, #tpu.memory_space<vmem>>, %arg3: memref<2x16xf32, #tpu.memory_space<vmem>>, %arg4: memref<32x32xbf16, #tpu.memory_space<vmem>>, %arg5: memref<32x32xbf16, #tpu.memory_space<vmem>>, %arg6: memref<1x32xf32, #tpu.memory_space<vmem>>, %arg7: memref<32x32xbf16, #tpu.memory_space<vmem>>, %arg8: memref<1x32xf32, #tpu.memory_space<vmem>>, %arg9: memref<32x128xbf16, #tpu.memory_space<vmem>>, %arg10: memref<1x128xf32, #tpu.memory_space<vmem>>, %arg11: memref<16x16xbf16, #tpu.memory_space<vmem>>, %arg12: memref<16x16xbf16, #tpu.memory_space<vmem>>, %arg13: memref<1x16xf32, #tpu.memory_space<vmem>>, %arg14: memref<16x16xbf16, #tpu.memory_space<vmem>>, %arg15: memref<1x16xf32, #tpu.memory_space<vmem>>, %arg16: memref<16x128xbf16, #tpu.memory_space<vmem>>, %arg17: memref<1x128xf32, #tpu.memory_space<vmem>>, %arg18: memref<8x128xf32, #tpu.memory_space<vmem>>, %arg19: memref<2x128xf32, #tpu.memory_space<vmem>>) attributes {dimension_semantics = [], scalar_prefetch = 0 : i64, scratch_operands = 0 : i64, tpu.core_type = #tpu.core_type<tc>} {
    %c0 = arith.constant 0 : index
    %c0_0 = arith.constant 0 : index
    %0 = vector.load %arg0[%c0, %c0_0] : memref<8x32xf32, #tpu.memory_space<vmem>>, vector<8x32xf32>
    %c0_1 = arith.constant 0 : index
    %c0_2 = arith.constant 0 : index
    %1 = vector.load %arg1[%c0_1, %c0_2] : memref<8x32xf32, #tpu.memory_space<vmem>>, vector<8x32xf32>
    %c0_3 = arith.constant 0 : index
    %c0_4 = arith.constant 0 : index
    %2 = vector.load %arg4[%c0_3, %c0_4] : memref<32x32xbf16, #tpu.memory_space<vmem>>, vector<32x32xbf16>
    %c0_5 = arith.constant 0 : index
    %c0_6 = arith.constant 0 : index
    %3 = vector.load %arg5[%c0_5, %c0_6] : memref<32x32xbf16, #tpu.memory_space<vmem>>, vector<32x32xbf16>
    %c0_7 = arith.constant 0 : index
    %c0_8 = arith.constant 0 : index
    %4 = vector.load %arg6[%c0_7, %c0_8] : memref<1x32xf32, #tpu.memory_space<vmem>>, vector<1x32xf32>
    %c0_9 = arith.constant 0 : index
    %c0_10 = arith.constant 0 : index
    %5 = vector.load %arg7[%c0_9, %c0_10] : memref<32x32xbf16, #tpu.memory_space<vmem>>, vector<32x32xbf16>
    %c0_11 = arith.constant 0 : index
    %c0_12 = arith.constant 0 : index
    %6 = vector.load %arg8[%c0_11, %c0_12] : memref<1x32xf32, #tpu.memory_space<vmem>>, vector<1x32xf32>
    %c0_13 = arith.constant 0 : index
    %c0_14 = arith.constant 0 : index
    %7 = vector.load %arg9[%c0_13, %c0_14] : memref<32x128xbf16, #tpu.memory_space<vmem>>, vector<32x128xbf16>
    %c0_15 = arith.constant 0 : index
    %c0_16 = arith.constant 0 : index
    %8 = vector.load %arg10[%c0_15, %c0_16] : memref<1x128xf32, #tpu.memory_space<vmem>>, vector<1x128xf32>
    %9 = arith.truncf %0 : vector<8x32xf32> to vector<8x32xbf16>
    %cst = arith.constant dense<0.000000e+00> : vector<8x32xf32>
    %10 = tpu.matmul %9, %2, %cst {dimension_numbers = #tpu.dot_dimension_numbers<[1], [0], [0], [1], [0, 0, 1, 1], [], []>} : vector<8x32xbf16>, vector<32x32xbf16>, vector<8x32xf32> -> vector<8x32xf32>
    %11 = arith.truncf %1 : vector<8x32xf32> to vector<8x32xbf16>
    %cst_17 = arith.constant dense<0.000000e+00> : vector<8x32xf32>
    %12 = tpu.matmul %11, %3, %cst_17 {dimension_numbers = #tpu.dot_dimension_numbers<[1], [0], [0], [1], [0, 0, 1, 1], [], []>} : vector<8x32xbf16>, vector<32x32xbf16>, vector<8x32xf32> -> vector<8x32xf32>
    %13 = arith.addf %10, %12 : vector<8x32xf32>
    %14 = vector.broadcast %4 : vector<1x32xf32> to vector<8x32xf32>
    %15 = arith.addf %13, %14 : vector<8x32xf32>
    %cst_18 = arith.constant 0.000000e+00 : f32
    %16 = vector.broadcast %cst_18 : f32 to vector<8x32xf32>
    %17 = arith.maximumf %15, %16 : vector<8x32xf32>
    %18 = arith.truncf %17 : vector<8x32xf32> to vector<8x32xbf16>
    %cst_19 = arith.constant dense<0.000000e+00> : vector<8x32xf32>
    %19 = tpu.matmul %18, %5, %cst_19 {dimension_numbers = #tpu.dot_dimension_numbers<[1], [0], [0], [1], [0, 0, 1, 1], [], []>} : vector<8x32xbf16>, vector<32x32xbf16>, vector<8x32xf32> -> vector<8x32xf32>
    %20 = vector.broadcast %6 : vector<1x32xf32> to vector<8x32xf32>
    %21 = arith.addf %19, %20 : vector<8x32xf32>
    %cst_20 = arith.constant 0.000000e+00 : f32
    %22 = vector.broadcast %cst_20 : f32 to vector<8x32xf32>
    %23 = arith.maximumf %21, %22 : vector<8x32xf32>
    %24 = arith.truncf %23 : vector<8x32xf32> to vector<8x32xbf16>
    %cst_21 = arith.constant dense<0.000000e+00> : vector<8x128xf32>
    %25 = tpu.matmul %24, %7, %cst_21 {dimension_numbers = #tpu.dot_dimension_numbers<[1], [0], [0], [1], [0, 0, 1, 1], [], []>} : vector<8x32xbf16>, vector<32x128xbf16>, vector<8x128xf32> -> vector<8x128xf32>
    %26 = vector.broadcast %8 : vector<1x128xf32> to vector<8x128xf32>
    %27 = arith.addf %25, %26 : vector<8x128xf32>
    %c0_22 = arith.constant 0 : index
    %c0_23 = arith.constant 0 : index
    %28 = vector.load %arg18[%c0_22, %c0_23] : memref<8x128xf32, #tpu.memory_space<vmem>>, vector<8x128xf32>
    tpu.vector_store %arg18[%c0_22, %c0_23], %27 {strides = array<i32>} : memref<8x128xf32, #tpu.memory_space<vmem>>, vector<8x128xf32>,
    %c0_24 = arith.constant 0 : index
    %c0_25 = arith.constant 0 : index
    %29 = vector.load %arg2[%c0_24, %c0_25] : memref<2x16xf32, #tpu.memory_space<vmem>>, vector<2x16xf32>
    %c0_26 = arith.constant 0 : index
    %c0_27 = arith.constant 0 : index
    %30 = vector.load %arg3[%c0_26, %c0_27] : memref<2x16xf32, #tpu.memory_space<vmem>>, vector<2x16xf32>
    %c0_28 = arith.constant 0 : index
    %c0_29 = arith.constant 0 : index
    %31 = vector.load %arg11[%c0_28, %c0_29] : memref<16x16xbf16, #tpu.memory_space<vmem>>, vector<16x16xbf16>
    %c0_30 = arith.constant 0 : index
    %c0_31 = arith.constant 0 : index
    %32 = vector.load %arg12[%c0_30, %c0_31] : memref<16x16xbf16, #tpu.memory_space<vmem>>, vector<16x16xbf16>
    %c0_32 = arith.constant 0 : index
    %c0_33 = arith.constant 0 : index
    %33 = vector.load %arg13[%c0_32, %c0_33] : memref<1x16xf32, #tpu.memory_space<vmem>>, vector<1x16xf32>
    %c0_34 = arith.constant 0 : index
    %c0_35 = arith.constant 0 : index
    %34 = vector.load %arg14[%c0_34, %c0_35] : memref<16x16xbf16, #tpu.memory_space<vmem>>, vector<16x16xbf16>
    %c0_36 = arith.constant 0 : index
    %c0_37 = arith.constant 0 : index
    %35 = vector.load %arg15[%c0_36, %c0_37] : memref<1x16xf32, #tpu.memory_space<vmem>>, vector<1x16xf32>
    %c0_38 = arith.constant 0 : index
    %c0_39 = arith.constant 0 : index
    %36 = vector.load %arg16[%c0_38, %c0_39] : memref<16x128xbf16, #tpu.memory_space<vmem>>, vector<16x128xbf16>
    %c0_40 = arith.constant 0 : index
    %c0_41 = arith.constant 0 : index
    %37 = vector.load %arg17[%c0_40, %c0_41] : memref<1x128xf32, #tpu.memory_space<vmem>>, vector<1x128xf32>
    %38 = arith.truncf %29 : vector<2x16xf32> to vector<2x16xbf16>
    %cst_42 = arith.constant dense<0.000000e+00> : vector<2x16xf32>
    %39 = tpu.matmul %38, %31, %cst_42 {dimension_numbers = #tpu.dot_dimension_numbers<[1], [0], [0], [1], [0, 0, 1, 1], [], []>} : vector<2x16xbf16>, vector<16x16xbf16>, vector<2x16xf32> -> vector<2x16xf32>
    %40 = arith.truncf %30 : vector<2x16xf32> to vector<2x16xbf16>
    %cst_43 = arith.constant dense<0.000000e+00> : vector<2x16xf32>
    %41 = tpu.matmul %40, %32, %cst_43 {dimension_numbers = #tpu.dot_dimension_numbers<[1], [0], [0], [1], [0, 0, 1, 1], [], []>} : vector<2x16xbf16>, vector<16x16xbf16>, vector<2x16xf32> -> vector<2x16xf32>
    %42 = arith.addf %39, %41 : vector<2x16xf32>
    %43 = vector.broadcast %33 : vector<1x16xf32> to vector<2x16xf32>
    %44 = arith.addf %42, %43 : vector<2x16xf32>
    %cst_44 = arith.constant 0.000000e+00 : f32
    %45 = vector.broadcast %cst_44 : f32 to vector<2x16xf32>
    %46 = arith.maximumf %44, %45 : vector<2x16xf32>
    %47 = arith.truncf %46 : vector<2x16xf32> to vector<2x16xbf16>
    %cst_45 = arith.constant dense<0.000000e+00> : vector<2x16xf32>
    %48 = tpu.matmul %47, %34, %cst_45 {dimension_numbers = #tpu.dot_dimension_numbers<[1], [0], [0], [1], [0, 0, 1, 1], [], []>} : vector<2x16xbf16>, vector<16x16xbf16>, vector<2x16xf32> -> vector<2x16xf32>
    %49 = vector.broadcast %35 : vector<1x16xf32> to vector<2x16xf32>
    %50 = arith.addf %48, %49 : vector<2x16xf32>
    %cst_46 = arith.constant 0.000000e+00 : f32
    %51 = vector.broadcast %cst_46 : f32 to vector<2x16xf32>
    %52 = arith.maximumf %50, %51 : vector<2x16xf32>
    %53 = arith.truncf %52 : vector<2x16xf32> to vector<2x16xbf16>
    %cst_47 = arith.constant dense<0.000000e+00> : vector<2x128xf32>
    %54 = tpu.matmul %53, %36, %cst_47 {dimension_numbers = #tpu.dot_dimension_numbers<[1], [0], [0], [1], [0, 0, 1, 1], [], []>} : vector<2x16xbf16>, vector<16x128xbf16>, vector<2x128xf32> -> vector<2x128xf32>
    %55 = vector.broadcast %37 : vector<1x128xf32> to vector<2x128xf32>
    %56 = arith.addf %54, %55 : vector<2x128xf32>
    %c0_48 = arith.constant 0 : index
    %c0_49 = arith.constant 0 : index
    %57 = vector.load %arg19[%c0_48, %c0_49] : memref<2x128xf32, #tpu.memory_space<vmem>>, vector<2x128xf32>
    tpu.vector_store %arg19[%c0_48, %c0_49], %56 {strides = array<i32>} : memref<2x128xf32, #tpu.memory_space<vmem>>, vector<2x128xf32>,
    return
  }
}

</mosaic_0001>

<llo_original>
// kernel: semantics_color_forward.1
$region0: #{semantics_color_forward.1}
  #allocation0 [shape = 'u32[]', space=smem, size = 0x4, offset = 0x4, fixed_abs, tag = 'smem constant byte address 0x4 - core index']
  #allocation1 [shape = 'u32[144,128]{1,0:T(1,128)}', space=vmem, size = 0x12000, scoped, tag = 'internal scratch']
  %s0 = inlined_call_operand.hbm [shape: f32[8,32], index: 0, kind: input, shape index: {}]
  %s1 = inlined_call_operand.hbm [shape: f32[8,32], index: 1, kind: input, shape index: {}]
  %s2 = inlined_call_operand.hbm [shape: f32[2,16], index: 2, kind: input, shape index: {}]
  %s3 = inlined_call_operand.hbm [shape: f32[2,16], index: 3, kind: input, shape index: {}]
  %s4 = inlined_call_operand.vmem [shape: bf16[32,32], index: 4, kind: input, shape index: {}]
  %s5 = inlined_call_operand.vmem [shape: bf16[32,32], index: 5, kind: input, shape index: {}]
  %s6 = inlined_call_operand.hbm [shape: f32[1,32], index: 6, kind: input, shape index: {}]
  %s7 = inlined_call_operand.hbm [shape: bf16[32,32], index: 7, kind: input, shape index: {}]
  %s8 = inlined_call_operand.hbm [shape: f32[1,32], index: 8, kind: input, shape index: {}]
  %s9 = inlined_call_operand.hbm [shape: bf16[32,128], index: 9, kind: input, shape index: {}]
  %s10 = inlined_call_operand.hbm [shape: f32[1,128], index: 10, kind: input, shape index: {}]
  %s11 = inlined_call_operand.vmem [shape: bf16[16,16], index: 11, kind: input, shape index: {}]
  %s12 = inlined_call_operand.vmem [shape: bf16[16,16], index: 12, kind: input, shape index: {}]
  %s13 = inlined_call_operand.hbm [shape: f32[1,16], index: 13, kind: input, shape index: {}]
  %s14 = inlined_call_operand.vmem [shape: bf16[16,16], index: 14, kind: input, shape index: {}]
  %s15 = inlined_call_operand.hbm [shape: f32[1,16], index: 15, kind: input, shape index: {}]
  %s16 = inlined_call_operand.vmem [shape: bf16[16,128], index: 16, kind: input, shape index: {}]
  %s17 = inlined_call_operand.hbm [shape: f32[1,128], index: 17, kind: input, shape index: {}]
  %s18 = inlined_call_operand.hbm [shape: f32[8,128], index: 18, kind: output, shape index: {0}]
  %s19 = inlined_call_operand.hbm [shape: f32[2,128], index: 19, kind: output, shape index: {1}]
  %20 = xla_tuple %s18, %s19
  %s21 = sld [smem:[#allocation0]]
  $region138: #{semantics_color_forward.1} parent=0
    _
  %s23 = ssub.s32 1, %s21
  %s24 = scalar_select 0, %s23, %s21
  $region1: #{semantics_color_forward.1} parent=0
    #allocation2 [shape = 'u8[4096]{0}', space=vmem, size = 0x1000, scoped, tag = 'input window, operand 0, single buffered']
    #allocation3 [shape = 's32[1]{0}', space=sflag, size = 0x4, scoped, tag = 'scoped memory for semantics_color_forward.1']
    #allocation4 [shape = 's32[1]{0}', space=sflag, size = 0x4, scoped, tag = 'scoped memory for semantics_color_forward.1']
    #allocation5 [shape = 'u8[4096]{0}', space=vmem, size = 0x1000, scoped, tag = 'input window, operand 1, single buffered']
    #allocation6 [shape = 's32[1]{0}', space=sflag, size = 0x4, scoped, tag = 'scoped memory for semantics_color_forward.1']
    #allocation7 [shape = 'u8[1024]{0}', space=vmem, size = 0x400, scoped, tag = 'input window, operand 2, single buffered']
    #allocation8 [shape = 'u8[1024]{0}', space=vmem, size = 0x400, scoped, tag = 'input window, operand 3, single buffered']
    #allocation9 [shape = 's32[1]{0}', space=sflag, size = 0x4, scoped, tag = 'scoped memory for semantics_color_forward.1']
    #allocation10 [shape = 'u8[512]{0}', space=vmem, size = 0x400, scoped, tag = 'input window, operand 6, single buffered']
    #allocation11 [shape = 'u8[8192]{0}', space=vmem, size = 0x2000, scoped, tag = 'input window, operand 7, single buffered']
    #allocation12 [shape = 's32[1]{0}', space=sflag, size = 0x4, scoped, tag = 'scoped memory for semantics_color_forward.1']
    #allocation13 [shape = 'u8[512]{0}', space=vmem, size = 0x400, scoped, tag = 'input window, operand 8, single buffered']
    #allocation14 [shape = 'u8[8192]{0}', space=vmem, size = 0x2000, scoped, tag = 'input window, operand 9, single buffered']
    #allocation15 [shape = 's32[1]{0}', space=sflag, size = 0x4, scoped, tag = 'scoped memory for semantics_color_forward.1']
    #allocation16 [shape = 'u8[512]{0}', space=vmem, size = 0x400, scoped, tag = 'input window, operand 10, single buffered']
    #allocation17 [shape = 'u8[512]{0}', space=vmem, size = 0x400, scoped, tag = 'input window, operand 13, single buffered']
    #allocation18 [shape = 's32[1]{0}', space=sflag, size = 0x4, scoped, tag = 'scoped memory for semantics_color_forward.1']
    #allocation19 [shape = 'u8[512]{0}', space=vmem, size = 0x400, scoped, tag = 'input window, operand 15, single buffered']
    #allocation20 [shape = 'u8[512]{0}', space=vmem, size = 0x400, scoped, tag = 'input window, operand 17, single buffered']
    #allocation21 [shape = 's32[1]{0}', space=sflag, size = 0x4, scoped, tag = 'scoped memory for semantics_color_forward.1']
    #allocation22 [shape = 'u8[4096]{0}', space=vmem, size = 0x1000, scoped, tag = 'output window, operand 0, single buffered']
    #allocation23 [shape = 'u8[1024]{0}', space=vmem, size = 0x400, scoped, tag = 'output window, operand 1, single buffered']
    #allocation24 [shape = 's32[1]{0}', space=sflag, size = 0x4, scoped, tag = 'scoped memory for semantics_color_forward.1']
    %25 = vsyncpa [#allocation3], 0
    %26 = vsyncpa [#allocation6], 0
    %27 = vsyncpa [#allocation9], 0
    %28 = vsyncpa [#allocation12], 0
    %29 = vsyncpa [#allocation15], 0
    %30 = vsyncpa [#allocation18], 0
    %31 = vsyncpa [#allocation21], 0
    %32 = vsyncpa [#allocation4], 0
    %33 = vsyncpa [#allocation24], 0
    // Predicated region
    $region2: #{semantics_color_forward.1} parent=1 // pred_check
      _
    $region3: #{semantics_color_forward.1} parent=1 // pred_check_branch
      %35 = sbr.rel (0) target = $region5
    $region4: #{semantics_color_forward.1} parent=1 // pred_region
      %s37 = ssub.s32 128, 128
      %38 = vsyncadd [#allocation3], %s37
      %s40 = sshll.u32 [#allocation2], 4
      %s41 = int_to_ptr.vmem [resolvable:$true] %s40
      %43 = dma.hbm_to_vmem [thread:$0]  %s0, 128, %s41, [#allocation3]
    $region5: #{semantics_color_forward.1} parent=1 // pred_fallthru
      _
    // Predicated region
    $region6: #{semantics_color_forward.1} parent=1 // pred_check
      _
    $region7: #{semantics_color_forward.1} parent=1 // pred_check_branch
      %45 = sbr.rel (0) target = $region9
    $region8: #{semantics_color_forward.1} parent=1 // pred_region
      %s47 = ssub.s32 128, 128
      %48 = vsyncadd [#allocation6], %s47
      %s50 = sshll.u32 [#allocation5], 4
      %s51 = int_to_ptr.vmem [resolvable:$true] %s50
      %53 = dma.hbm_to_vmem [thread:$0]  %s1, 128, %s51, [#allocation6]
    $region9: #{semantics_color_forward.1} parent=1 // pred_fallthru
      _
    // Predicated region
    $region10: #{semantics_color_forward.1} parent=1 // pred_check
      _
    $region11: #{semantics_color_forward.1} parent=1 // pred_check_branch
      %55 = sbr.rel (0) target = $region13
    $region12: #{semantics_color_forward.1} parent=1 // pred_region
      %s57 = ssub.s32 32, 32
      %58 = vsyncadd [#allocation6], %s57
      %s60 = sshll.u32 [#allocation7], 4
      %s61 = int_to_ptr.vmem [resolvable:$true] %s60
      %63 = dma.hbm_to_vmem [thread:$0]  %s2, 32, %s61, [#allocation6]
    $region13: #{semantics_color_forward.1} parent=1 // pred_fallthru
      _
    // Predicated region
    $region14: #{semantics_color_forward.1} parent=1 // pred_check
      _
    $region15: #{semantics_color_forward.1} parent=1 // pred_check_branch
      %65 = sbr.rel (0) target = $region17
    $region16: #{semantics_color_forward.1} parent=1 // pred_region
      %s67 = ssub.s32 32, 32
      %68 = vsyncadd [#allocation9], %s67
      %s70 = sshll.u32 [#allocation8], 4
      %s71 = int_to_ptr.vmem [resolvable:$true] %s70
      %73 = dma.hbm_to_vmem [thread:$0]  %s3, 32, %s71, [#allocation9]
    $region17: #{semantics_color_forward.1} parent=1 // pred_fallthru
      _
    // Predicated region
    $region18: #{semantics_color_forward.1} parent=1 // pred_check
      _
    $region19: #{semantics_color_forward.1} parent=1 // pred_check_branch
      %75 = sbr.rel (0) target = $region21
    $region20: #{semantics_color_forward.1} parent=1 // pred_region
      _
    $region21: #{semantics_color_forward.1} parent=1 // pred_fallthru
      _
    // Predicated region
    $region22: #{semantics_color_forward.1} parent=1 // pred_check
      _
    $region23: #{semantics_color_forward.1} parent=1 // pred_check_branch
      %77 = sbr.rel (0) target = $region25
    $region24: #{semantics_color_forward.1} parent=1 // pred_region
      _
    $region25: #{semantics_color_forward.1} parent=1 // pred_fallthru
      _
    // Predicated region
    $region26: #{semantics_color_forward.1} parent=1 // pred_check
      _
    $region27: #{semantics_color_forward.1} parent=1 // pred_check_branch
      %79 = sbr.rel (0) target = $region29
    $region28: #{semantics_color_forward.1} parent=1 // pred_region
      %s81 = ssub.s32 16, 16
      %82 = vsyncadd [#allocation9], %s81
      %s84 = sshll.u32 [#allocation10], 4
      %s85 = int_to_ptr.vmem [resolvable:$true] %s84
      %87 = dma.hbm_to_vmem [thread:$0]  %s6, 16, %s85, [#allocation9]
    $region29: #{semantics_color_forward.1} parent=1 // pred_fallthru
      _
    // Predicated region
    $region30: #{semantics_color_forward.1} parent=1 // pred_check
      _
    $region31: #{semantics_color_forward.1} parent=1 // pred_check_branch
      %89 = sbr.rel (0) target = $region33
    $region32: #{semantics_color_forward.1} parent=1 // pred_region
      %s91 = ssub.s32 256, 256
      %92 = vsyncadd [#allocation12], %s91
      %s93 = sshll.u32 [#allocation11], 4
      %s94 = int_to_ptr.vmem [resolvable:$true] %s93
      %99 = dma.hbm_to_vmem [thread:$0]  %s7, 256, %s94, [#allocation12], 64, 64, 4
    $region33: #{semantics_color_forward.1} parent=1 // pred_fallthru
      _
    // Predicated region
    $region34: #{semantics_color_forward.1} parent=1 // pred_check
      _
    $region35: #{semantics_color_forward.1} parent=1 // pred_check_branch
      %101 = sbr.rel (0) target = $region37
    $region36: #{semantics_color_forward.1} parent=1 // pred_region
      %s103 = ssub.s32 16, 16
      %104 = vsyncadd [#allocation12], %s103
      %s106 = sshll.u32 [#allocation13], 4
      %s107 = int_to_ptr.vmem [resolvable:$true] %s106
      %109 = dma.hbm_to_vmem [thread:$0]  %s8, 16, %s107, [#allocation12]
    $region37: #{semantics_color_forward.1} parent=1 // pred_fallthru
      _
    // Predicated region
    $region38: #{semantics_color_forward.1} parent=1 // pred_check
      _
    $region39: #{semantics_color_forward.1} parent=1 // pred_check_branch
      %111 = sbr.rel (0) target = $region41
    $region40: #{semantics_color_forward.1} parent=1 // pred_region
      %s113 = ssub.s32 256, 256
      %114 = vsyncadd [#allocation15], %s113
      %s115 = sshll.u32 [#allocation14], 4
      %s116 = int_to_ptr.vmem [resolvable:$true] %s115
      %121 = dma.hbm_to_vmem [thread:$0]  %s9, 256, %s116, [#allocation15], 64, 64, 4
    $region41: #{semantics_color_forward.1} parent=1 // pred_fallthru
      _
    // Predicated region
    $region42: #{semantics_color_forward.1} parent=1 // pred_check
      _
    $region43: #{semantics_color_forward.1} parent=1 // pred_check_branch
      %123 = sbr.rel (0) target = $region45
    $region44: #{semantics_color_forward.1} parent=1 // pred_region
      %s125 = ssub.s32 16, 16
      %126 = vsyncadd [#allocation15], %s125
      %s128 = sshll.u32 [#allocation16], 4
      %s129 = int_to_ptr.vmem [resolvable:$true] %s128
      %131 = dma.hbm_to_vmem [thread:$0]  %s10, 16, %s129, [#allocation15]
    $region45: #{semantics_color_forward.1} parent=1 // pred_fallthru
      _
    // Predicated region
    $region46: #{semantics_color_forward.1} parent=1 // pred_check
      _
    $region47: #{semantics_color_forward.1} parent=1 // pred_check_branch
      %133 = sbr.rel (0) target = $region49
    $region48: #{semantics_color_forward.1} parent=1 // pred_region
      _
    $region49: #{semantics_color_forward.1} parent=1 // pred_fallthru
      _
    // Predicated region
    $region50: #{semantics_color_forward.1} parent=1 // pred_check
      _
    $region51: #{semantics_color_forward.1} parent=1 // pred_check_branch
      %135 = sbr.rel (0) target = $region53
    $region52: #{semantics_color_forward.1} parent=1 // pred_region
      _
    $region53: #{semantics_color_forward.1} parent=1 // pred_fallthru
      _
    // Predicated region
    $region54: #{semantics_color_forward.1} parent=1 // pred_check
      _
    $region55: #{semantics_color_forward.1} parent=1 // pred_check_branch
      %137 = sbr.rel (0) target = $region57
    $region56: #{semantics_color_forward.1} parent=1 // pred_region
      %s139 = ssub.s32 16, 16
      %140 = vsyncadd [#allocation18], %s139
      %s142 = sshll.u32 [#allocation17], 4
      %s143 = int_to_ptr.vmem [resolvable:$true] %s142
      %145 = dma.hbm_to_vmem [thread:$0]  %s13, 16, %s143, [#allocation18]
    $region57: #{semantics_color_forward.1} parent=1 // pred_fallthru
      _
    // Predicated region
    $region58: #{semantics_color_forward.1} parent=1 // pred_check
      _
    $region59: #{semantics_color_forward.1} parent=1 // pred_check_branch
      %147 = sbr.rel (0) target = $region61
    $region60: #{semantics_color_forward.1} parent=1 // pred_region
      _
    $region61: #{semantics_color_forward.1} parent=1 // pred_fallthru
      _
    // Predicated region
    $region62: #{semantics_color_forward.1} parent=1 // pred_check
      _
    $region63: #{semantics_color_forward.1} parent=1 // pred_check_branch
      %149 = sbr.rel (0) target = $region65
    $region64: #{semantics_color_forward.1} parent=1 // pred_region
      %s151 = ssub.s32 16, 16
      %152 = vsyncadd [#allocation18], %s151
      %s154 = sshll.u32 [#allocation19], 4
      %s155 = int_to_ptr.vmem [resolvable:$true] %s154
      %157 = dma.hbm_to_vmem [thread:$0]  %s15, 16, %s155, [#allocation18]
    $region65: #{semantics_color_forward.1} parent=1 // pred_fallthru
      _
    // Predicated region
    $region66: #{semantics_color_forward.1} parent=1 // pred_check
      _
    $region67: #{semantics_color_forward.1} parent=1 // pred_check_branch
      %159 = sbr.rel (0) target = $region69
    $region68: #{semantics_color_forward.1} parent=1 // pred_region
      _
    $region69: #{semantics_color_forward.1} parent=1 // pred_fallthru
      _
    // Predicated region
    $region70: #{semantics_color_forward.1} parent=1 // pred_check
      _
    $region71: #{semantics_color_forward.1} parent=1 // pred_check_branch
      %161 = sbr.rel (0) target = $region73
    $region72: #{semantics_color_forward.1} parent=1 // pred_region
      %s163 = ssub.s32 16, 16
      %164 = vsyncadd [#allocation21], %s163
      %s166 = sshll.u32 [#allocation20], 4
      %s167 = int_to_ptr.vmem [resolvable:$true] %s166
      %169 = dma.hbm_to_vmem [thread:$0]  %s17, 16, %s167, [#allocation21]
    $region73: #{semantics_color_forward.1} parent=1 // pred_fallthru
      _
    // Predicated region
    $region74: #{semantics_color_forward.1} parent=1 // pred_check
      _
    $region75: #{semantics_color_forward.1} parent=1 // pred_check_branch
      %171 = sbr.rel (0) target = $region77
    $region76: #{semantics_color_forward.1} parent=1 // pred_region
      %172 = dma.done [#allocation3], 128
    $region77: #{semantics_color_forward.1} parent=1 // pred_fallthru
      _
    // Predicated region
    $region78: #{semantics_color_forward.1} parent=1 // pred_check
      _
    $region79: #{semantics_color_forward.1} parent=1 // pred_check_branch
      %174 = sbr.rel (0) target = $region81
    $region80: #{semantics_color_forward.1} parent=1 // pred_region
      %175 = dma.done [#allocation6], 128
    $region81: #{semantics_color_forward.1} parent=1 // pred_fallthru
      _
    // Predicated region
    $region82: #{semantics_color_forward.1} parent=1 // pred_check
      _
    $region83: #{semantics_color_forward.1} parent=1 // pred_check_branch
      %177 = sbr.rel (0) target = $region85
    $region84: #{semantics_color_forward.1} parent=1 // pred_region
      %178 = dma.done [#allocation6], 32
    $region85: #{semantics_color_forward.1} parent=1 // pred_fallthru
      _
    // Predicated region
    $region86: #{semantics_color_forward.1} parent=1 // pred_check
      _
    $region87: #{semantics_color_forward.1} parent=1 // pred_check_branch
      %180 = sbr.rel (0) target = $region89
    $region88: #{semantics_color_forward.1} parent=1 // pred_region
      %181 = dma.done [#allocation9], 32
    $region89: #{semantics_color_forward.1} parent=1 // pred_fallthru
      _
    // Predicated region
    $region90: #{semantics_color_forward.1} parent=1 // pred_check
      _
    $region91: #{semantics_color_forward.1} parent=1 // pred_check_branch
      %183 = sbr.rel (0) target = $region93
    $region92: #{semantics_color_forward.1} parent=1 // pred_region
      %184 = dma.done [#allocation9], 16
    $region93: #{semantics_color_forward.1} parent=1 // pred_fallthru
      _
    // Predicated region
    $region94: #{semantics_color_forward.1} parent=1 // pred_check
      _
    $region95: #{semantics_color_forward.1} parent=1 // pred_check_branch
      %186 = sbr.rel (0) target = $region97
    $region96: #{semantics_color_forward.1} parent=1 // pred_region
      %187 = dma.done [#allocation12], 256
    $region97: #{semantics_color_forward.1} parent=1 // pred_fallthru
      _
    // Predicated region
    $region98: #{semantics_color_forward.1} parent=1 // pred_check
      _
    $region99: #{semantics_color_forward.1} parent=1 // pred_check_branch
      %189 = sbr.rel (0) target = $region101
    $region100: #{semantics_color_forward.1} parent=1 // pred_region
      %190 = dma.done [#allocation12], 16
    $region101: #{semantics_color_forward.1} parent=1 // pred_fallthru
      _
    // Predicated region
    $region102: #{semantics_color_forward.1} parent=1 // pred_check
      _
    $region103: #{semantics_color_forward.1} parent=1 // pred_check_branch
      %192 = sbr.rel (0) target = $region105
    $region104: #{semantics_color_forward.1} parent=1 // pred_region
      %193 = dma.done [#allocation15], 256
    $region105: #{semantics_color_forward.1} parent=1 // pred_fallthru
      _
    // Predicated region
    $region106: #{semantics_color_forward.1} parent=1 // pred_check
      _
    $region107: #{semantics_color_forward.1} parent=1 // pred_check_branch
      %195 = sbr.rel (0) target = $region109
    $region108: #{semantics_color_forward.1} parent=1 // pred_region
      %196 = dma.done [#allocation15], 16
    $region109: #{semantics_color_forward.1} parent=1 // pred_fallthru
      _
    // Predicated region
    $region110: #{semantics_color_forward.1} parent=1 // pred_check
      _
    $region111: #{semantics_color_forward.1} parent=1 // pred_check_branch
      %198 = sbr.rel (0) target = $region113
    $region112: #{semantics_color_forward.1} parent=1 // pred_region
      %199 = dma.done [#allocation18], 16
    $region113: #{semantics_color_forward.1} parent=1 // pred_fallthru
      _
    // Predicated region
    $region114: #{semantics_color_forward.1} parent=1 // pred_check
      _
    $region115: #{semantics_color_forward.1} parent=1 // pred_check_branch
      %201 = sbr.rel (0) target = $region117
    $region116: #{semantics_color_forward.1} parent=1 // pred_region
      %202 = dma.done [#allocation18], 16
    $region117: #{semantics_color_forward.1} parent=1 // pred_fallthru
      _
    // Predicated region
    $region118: #{semantics_color_forward.1} parent=1 // pred_check
      _
    $region119: #{semantics_color_forward.1} parent=1 // pred_check_branch
      %204 = sbr.rel (0) target = $region121
    $region120: #{semantics_color_forward.1} parent=1 // pred_region
      %205 = dma.done [#allocation21], 16
    $region121: #{semantics_color_forward.1} parent=1 // pred_fallthru
      _
    %v207 = vld [vmem:[#allocation2] sm:$0xff]
    %v208 = vld [vmem:[#allocation5] sm:$0xff]
    %v209 = vld [vmem:[%s4] sm:$0xf]
    %v210 = vld [vmem:[%s4 + $0x4] sm:$0xf]
    %v211 = vld [vmem:[%s4 + $0x8] sm:$0xf]
    %v212 = vld [vmem:[%s4 + $0xc] sm:$0xf]
    %v213 = vld [vmem:[%s5] sm:$0xf]
    %v214 = vld [vmem:[%s5 + $0x4] sm:$0xf]
    %v215 = vld [vmem:[%s5 + $0x8] sm:$0xf]
    %v216 = vld [vmem:[%s5 + $0xc] sm:$0xf]
    %v217 = vld [vmem:[#allocation10] sm:$0x1]
    %v218 = vld [vmem:[#allocation11] sm:$0xf]
    %v219 = vld [vmem:[#allocation11 + $0x4] sm:$0xf]
    %v220 = vld [vmem:[#allocation11 + $0x8] sm:$0xf]
    %v221 = vld [vmem:[#allocation11 + $0xc] sm:$0xf]
    %v222 = vld [vmem:[#allocation13] sm:$0x1]
    %v223 = vld [vmem:[#allocation14] sm:$0xf]
    %v224 = vld [vmem:[#allocation14 + $0x4] sm:$0xf]
    %v225 = vld [vmem:[#allocation14 + $0x8] sm:$0xf]
    %v226 = vld [vmem:[#allocation14 + $0xc] sm:$0xf]
    %v227 = vld [vmem:[#allocation16] sm:$0x1]
    %v228 = vpack.c.bf16 %v207, %v207
    %v229 = vpack.c.bf16 %v208, %v208
    %v234 = vunpack.c.l.b16 %v213
    %v235 = vunpack.c.l.b16 %v214
    %v236 = vunpack.c.l.b16 %v215
    %v237 = vunpack.c.l.b16 %v216
    %v238 = vpack.c.b16 %v235, %v234
    %v239 = vpack.c.b16 %v237, %v236
    %vm242 = vcmask 261120
    %v244 = vsel %vm242, %v229, 0
    %246 = vmatprep.subr.bf16.mxu0 0
    %247 = vmatpush1.bf16.msra.mxu0 %v238
    %248 = vmatprep.subr.bf16.mxu0 0
    %249 = vmatpush1.bf16.msra.mxu0 %v239
    %250 = vmatprep.subr.bf16.mxu0 0
    %251 = vmatpush1.bf16.msra.mxu0 0
    %252 = vmatprep.subr.bf16.mxu0 0
    %253 = vmatpush1.bf16.msra.mxu0 0
    %254 = vmatprep.subr.bf16.mxu0 0
    %255 = vmatpush1.bf16.msra.mxu0 0
    %256 = vmatprep.subr.bf16.mxu0 0
    %257 = vmatpush1.bf16.msra.mxu0 0
    %258 = vmatprep.subr.bf16.mxu0 0
    %259 = vmatpush1.bf16.msra.mxu0 0
    %260 = vmatprep.subr.bf16.mxu0 0
    %261 = vmatpush1.bf16.msra.mxu0 0
    %262 = vmatprep.subr.bf16.mxu0 0
    %263 = vmatpush1.bf16.msra.mxu0 0
    %264 = vmatprep.subr.bf16.mxu0 0
    %265 = vmatpush1.bf16.msra.mxu0 0
    %266 = vmatprep.subr.bf16.mxu0 0
    %267 = vmatpush1.bf16.msra.mxu0 0
    %268 = vmatprep.subr.bf16.mxu0 0
    %269 = vmatpush1.bf16.msra.mxu0 0
    %270 = vmatprep.subr.bf16.mxu0 0
    %271 = vmatpush1.bf16.msra.mxu0 0
    %272 = vmatprep.subr.bf16.mxu0 0
    %273 = vmatpush1.bf16.msra.mxu0 0
    %274 = vmatprep.subr.bf16.mxu0 0
    %275 = vmatpush1.bf16.msra.mxu0 0
    %276 = vmatprep.subr.bf16.mxu0 0
    %277 = vmatpush1.bf16.msra.mxu0 0
    %278 = vmatprep.mubr.bf16.mxu0 0
    %279 = vmatmul.mubr.bf16.gmra.mrb[0].mxu0 %v244
    %v280 = vpop.f32.mrb[0].mxu0
    %v281 = vadd.f32 0.0, %v280
    %v282 = vpop.f32.mrb[0].mxu0
    %v283 = vpop.f32.mrb[0].mxu0
    %v284 = vpop.f32.mrb[0].mxu0
    %285 = vdwg.mxu0
    %v290 = vunpack.c.l.b16 %v209
    %v291 = vunpack.c.l.b16 %v210
    %v292 = vunpack.c.l.b16 %v211
    %v293 = vunpack.c.l.b16 %v212
    %v294 = vpack.c.b16 %v291, %v290
    %v295 = vpack.c.b16 %v293, %v292
    %v299 = vsel %vm242, %v228, 0
    %301 = vmatprep.subr.bf16.mxu0 0
    %302 = vmatpush1.bf16.msra.mxu0 %v294
    %303 = vmatprep.subr.bf16.mxu0 0
    %304 = vmatpush1.bf16.msra.mxu0 %v295
    %305 = vmatprep.subr.bf16.mxu0 0
    %306 = vmatpush1.bf16.msra.mxu0 0
    %307 = vmatprep.subr.bf16.mxu0 0
    %308 = vmatpush1.bf16.msra.mxu0 0
    %309 = vmatprep.subr.bf16.mxu0 0
    %310 = vmatpush1.bf16.msra.mxu0 0
    %311 = vmatprep.subr.bf16.mxu0 0
    %312 = vmatpush1.bf16.msra.mxu0 0
    %313 = vmatprep.subr.bf16.mxu0 0
    %314 = vmatpush1.bf16.msra.mxu0 0
    %315 = vmatprep.subr.bf16.mxu0 0
    %316 = vmatpush1.bf16.msra.mxu0 0
    %317 = vmatprep.subr.bf16.mxu0 0
    %318 = vmatpush1.bf16.msra.mxu0 0
    %319 = vmatprep.subr.bf16.mxu0 0
    %320 = vmatpush1.bf16.msra.mxu0 0
    %321 = vmatprep.subr.bf16.mxu0 0
    %322 = vmatpush1.bf16.msra.mxu0 0
    %323 = vmatprep.subr.bf16.mxu0 0
    %324 = vmatpush1.bf16.msra.mxu0 0
    %325 = vmatprep.subr.bf16.mxu0 0
    %326 = vmatpush1.bf16.msra.mxu0 0
    %327 = vmatprep.subr.bf16.mxu0 0
    %328 = vmatpush1.bf16.msra.mxu0 0
    %329 = vmatprep.subr.bf16.mxu0 0
    %330 = vmatpush1.bf16.msra.mxu0 0
    %331 = vmatprep.subr.bf16.mxu0 0
    %332 = vmatpush1.bf16.msra.mxu0 0
    %333 = vmatprep.mubr.bf16.mxu0 0
    %334 = vmatmul.mubr.bf16.gmra.mrb[0].mxu0 %v299
    %v335 = vpop.f32.mrb[0].mxu0
    %v336 = vadd.f32 %v281, %v335
    %v337 = vpop.f32.mrb[0].mxu0
    %v338 = vpop.f32.mrb[0].mxu0
    %v339 = vpop.f32.mrb[0].mxu0
    %340 = vdwg.mxu0
    %v342 = vlaneseq
    %v343 = vshrl.u32 %v342, 7
    %v344 = vsub.s32 0, %v343
    %v345 = vrot.slane %v217, %v344
    %v347 = vadd.f32 %v336, %v345
    %v348 = vmax.f32 %v347, 0.0
    %v349 = vpack.c.bf16 %v348, %v348
    %v351 = vlaneseq
    %v352 = vshrl.u32 %v351, 7
    %v353 = vsub.s32 0, %v352
    %v354 = vrot.slane %v222, %v353
    %v360 = vunpack.c.l.b16 %v218
    %v361 = vunpack.c.l.b16 %v219
    %v362 = vunpack.c.l.b16 %v220
    %v363 = vunpack.c.l.b16 %v221
    %v364 = vpack.c.b16 %v361, %v360
    %v365 = vpack.c.b16 %v363, %v362
    %v369 = vsel %vm242, %v349, 0
    %371 = vmatprep.subr.bf16.mxu0 0
    %372 = vmatpush1.bf16.msra.mxu0 %v364
    %373 = vmatprep.subr.bf16.mxu0 0
    %374 = vmatpush1.bf16.msra.mxu0 %v365
    %375 = vmatprep.subr.bf16.mxu0 0
    %376 = vmatpush1.bf16.msra.mxu0 0
    %377 = vmatprep.subr.bf16.mxu0 0
    %378 = vmatpush1.bf16.msra.mxu0 0
    %379 = vmatprep.subr.bf16.mxu0 0
    %380 = vmatpush1.bf16.msra.mxu0 0
    %381 = vmatprep.subr.bf16.mxu0 0
    %382 = vmatpush1.bf16.msra.mxu0 0
    %383 = vmatprep.subr.bf16.mxu0 0
    %384 = vmatpush1.bf16.msra.mxu0 0
    %385 = vmatprep.subr.bf16.mxu0 0
    %386 = vmatpush1.bf16.msra.mxu0 0
    %387 = vmatprep.subr.bf16.mxu0 0
    %388 = vmatpush1.bf16.msra.mxu0 0
    %389 = vmatprep.subr.bf16.mxu0 0
    %390 = vmatpush1.bf16.msra.mxu0 0
    %391 = vmatprep.subr.bf16.mxu0 0
    %392 = vmatpush1.bf16.msra.mxu0 0
    %393 = vmatprep.subr.bf16.mxu0 0
    %394 = vmatpush1.bf16.msra.mxu0 0
    %395 = vmatprep.subr.bf16.mxu0 0
    %396 = vmatpush1.bf16.msra.mxu0 0
    %397 = vmatprep.subr.bf16.mxu0 0
    %398 = vmatpush1.bf16.msra.mxu0 0
    %399 = vmatprep.subr.bf16.mxu0 0
    %400 = vmatpush1.bf16.msra.mxu0 0
    %401 = vmatprep.subr.bf16.mxu0 0
    %402 = vmatpush1.bf16.msra.mxu0 0
    %403 = vmatprep.mubr.bf16.mxu0 0
    %404 = vmatmul.mubr.bf16.gmra.mrb[0].mxu0 %v369
    %v405 = vpop.f32.mrb[0].mxu0
    %v406 = vadd.f32 %v354, %v405
    %v407 = vpop.f32.mrb[0].mxu0
    %v408 = vpop.f32.mrb[0].mxu0
    %v409 = vpop.f32.mrb[0].mxu0
    %410 = vdwg.mxu0
    %v411 = vmax.f32 %v406, 0.0
    %v412 = vpack.c.bf16 %v411, %v411
    %v414 = vlaneseq
    %v415 = vshrl.u32 %v414, 7
    %v416 = vsub.s32 0, %v415
    %v417 = vrot.slane %v227, %v416
    %v423 = vunpack.c.l.b16 %v223
    %v424 = vunpack.c.l.b16 %v224
    %v425 = vunpack.c.l.b16 %v225
    %v426 = vunpack.c.l.b16 %v226
    %v427 = vpack.c.b16 %v424, %v423
    %v428 = vpack.c.b16 %v426, %v425
    %v432 = vsel %vm242, %v412, 0
    %434 = vmatprep.subr.bf16.mxu0 0
    %435 = vmatpush1.bf16.msra.mxu0 %v427
    %436 = vmatprep.subr.bf16.mxu0 0
    %437 = vmatpush1.bf16.msra.mxu0 %v428
    %438 = vmatprep.subr.bf16.mxu0 0
    %439 = vmatpush1.bf16.msra.mxu0 0
    %440 = vmatprep.subr.bf16.mxu0 0
    %441 = vmatpush1.bf16.msra.mxu0 0
    %442 = vmatprep.subr.bf16.mxu0 0
    %443 = vmatpush1.bf16.msra.mxu0 0
    %444 = vmatprep.subr.bf16.mxu0 0
    %445 = vmatpush1.bf16.msra.mxu0 0
    %446 = vmatprep.subr.bf16.mxu0 0
    %447 = vmatpush1.bf16.msra.mxu0 0
    %448 = vmatprep.subr.bf16.mxu0 0
    %449 = vmatpush1.bf16.msra.mxu0 0
    %450 = vmatprep.subr.bf16.mxu0 0
    %451 = vmatpush1.bf16.msra.mxu0 0
    %452 = vmatprep.subr.bf16.mxu0 0
    %453 = vmatpush1.bf16.msra.mxu0 0
    %454 = vmatprep.subr.bf16.mxu0 0
    %455 = vmatpush1.bf16.msra.mxu0 0
    %456 = vmatprep.subr.bf16.mxu0 0
    %457 = vmatpush1.bf16.msra.mxu0 0
    %458 = vmatprep.subr.bf16.mxu0 0
    %459 = vmatpush1.bf16.msra.mxu0 0
    %460 = vmatprep.subr.bf16.mxu0 0
    %461 = vmatpush1.bf16.msra.mxu0 0
    %462 = vmatprep.subr.bf16.mxu0 0
    %463 = vmatpush1.bf16.msra.mxu0 0
    %464 = vmatprep.subr.bf16.mxu0 0
    %465 = vmatpush1.bf16.msra.mxu0 0
    %466 = vmatprep.mubr.bf16.mxu0 0
    %467 = vmatmul.mubr.bf16.gmra.mrb[0].mxu0 %v432
    %v468 = vpop.f32.mrb[0].mxu0
    %v469 = vadd.f32 %v417, %v468
    %v470 = vpop.f32.mrb[0].mxu0
    %v471 = vpop.f32.mrb[0].mxu0
    %v472 = vpop.f32.mrb[0].mxu0
    %473 = vdwg.mxu0
    %474 = vst [vmem:[#allocation22] sm:$0xff] %v469
    %v475 = vld [vmem:[#allocation7] sm:$0x3]
    %v476 = vld [vmem:[#allocation8] sm:$0x3]
    %v477 = vld [vmem:[%s11] sm:$0xf]
    %v478 = vld [vmem:[%s11 + $0x4] sm:$0xf]
    %v479 = vld [vmem:[%s12] sm:$0xf]
    %v480 = vld [vmem:[%s12 + $0x4] sm:$0xf]
    %v481 = vld [vmem:[#allocation17] sm:$0x1]
    %v482 = vld [vmem:[%s14] sm:$0xf]
    %v483 = vld [vmem:[%s14 + $0x4] sm:$0xf]
    %v484 = vld [vmem:[#allocation19] sm:$0x1]
    %v485 = vld [vmem:[%s16] sm:$0xf]
    %v486 = vld [vmem:[%s16 + $0x4] sm:$0xf]
    %v487 = vld [vmem:[#allocation20] sm:$0x1]
    %v488 = vpack.c.bf16 %v475, %v475
    %v489 = vpack.c.bf16 %v476, %v476
    %v492 = vunpack.c.l.b16 %v479
    %v493 = vunpack.c.l.b16 %v480
    %v494 = vpack.c.b16 %v493, %v492
    %vm496 = vcmask 130048
    %v498 = vsel %vm496, %v489, 0
    %500 = vmatprep.subr.bf16.mxu0 0
    %501 = vmatpush1.bf16.msra.mxu0 %v494
    %502 = vmatprep.subr.bf16.mxu0 0
    %503 = vmatpush1.bf16.msra.mxu0 0
    %504 = vmatprep.subr.bf16.mxu0 0
    %505 = vmatpush1.bf16.msra.mxu0 0
    %506 = vmatprep.subr.bf16.mxu0 0
    %507 = vmatpush1.bf16.msra.mxu0 0
    %508 = vmatprep.subr.bf16.mxu0 0
    %509 = vmatpush1.bf16.msra.mxu0 0
    %510 = vmatprep.subr.bf16.mxu0 0
    %511 = vmatpush1.bf16.msra.mxu0 0
    %512 = vmatprep.subr.bf16.mxu0 0
    %513 = vmatpush1.bf16.msra.mxu0 0
    %514 = vmatprep.subr.bf16.mxu0 0
    %515 = vmatpush1.bf16.msra.mxu0 0
    %516 = vmatprep.subr.bf16.mxu0 0
    %517 = vmatpush1.bf16.msra.mxu0 0
    %518 = vmatprep.subr.bf16.mxu0 0
    %519 = vmatpush1.bf16.msra.mxu0 0
    %520 = vmatprep.subr.bf16.mxu0 0
    %521 = vmatpush1.bf16.msra.mxu0 0
    %522 = vmatprep.subr.bf16.mxu0 0
    %523 = vmatpush1.bf16.msra.mxu0 0
    %524 = vmatprep.subr.bf16.mxu0 0
    %525 = vmatpush1.bf16.msra.mxu0 0
    %526 = vmatprep.subr.bf16.mxu0 0
    %527 = vmatpush1.bf16.msra.mxu0 0
    %528 = vmatprep.subr.bf16.mxu0 0
    %529 = vmatpush1.bf16.msra.mxu0 0
    %530 = vmatprep.subr.bf16.mxu0 0
    %531 = vmatpush1.bf16.msra.mxu0 0
    %532 = vmatprep.mubr.bf16.mxu0 0
    %533 = vmatmul.mubr.bf16.gmra.mrb[0].mxu0 %v498
    %v534 = vpop.f32.mrb[0].mxu0
    %v535 = vadd.f32 0.0, %v534
    %v536 = vpop.f32.mrb[0].mxu0
    %v537 = vpop.f32.mrb[0].mxu0
    %v538 = vpop.f32.mrb[0].mxu0
    %539 = vdwg.mxu0
    %v542 = vunpack.c.l.b16 %v477
    %v543 = vunpack.c.l.b16 %v478
    %v544 = vpack.c.b16 %v543, %v542
    %v547 = vsel %vm496, %v488, 0
    %549 = vmatprep.subr.bf16.mxu0 0
    %550 = vmatpush1.bf16.msra.mxu0 %v544
    %551 = vmatprep.subr.bf16.mxu0 0
    %552 = vmatpush1.bf16.msra.mxu0 0
    %553 = vmatprep.subr.bf16.mxu0 0
    %554 = vmatpush1.bf16.msra.mxu0 0
    %555 = vmatprep.subr.bf16.mxu0 0
    %556 = vmatpush1.bf16.msra.mxu0 0
    %557 = vmatprep.subr.bf16.mxu0 0
    %558 = vmatpush1.bf16.msra.mxu0 0
    %559 = vmatprep.subr.bf16.mxu0 0
    %560 = vmatpush1.bf16.msra.mxu0 0
    %561 = vmatprep.subr.bf16.mxu0 0
    %562 = vmatpush1.bf16.msra.mxu0 0
    %563 = vmatprep.subr.bf16.mxu0 0
    %564 = vmatpush1.bf16.msra.mxu0 0
    %565 = vmatprep.subr.bf16.mxu0 0
    %566 = vmatpush1.bf16.msra.mxu0 0
    %567 = vmatprep.subr.bf16.mxu0 0
    %568 = vmatpush1.bf16.msra.mxu0 0
    %569 = vmatprep.subr.bf16.mxu0 0
    %570 = vmatpush1.bf16.msra.mxu0 0
    %571 = vmatprep.subr.bf16.mxu0 0
    %572 = vmatpush1.bf16.msra.mxu0 0
    %573 = vmatprep.subr.bf16.mxu0 0
    %574 = vmatpush1.bf16.msra.mxu0 0
    %575 = vmatprep.subr.bf16.mxu0 0
    %576 = vmatpush1.bf16.msra.mxu0 0
    %577 = vmatprep.subr.bf16.mxu0 0
    %578 = vmatpush1.bf16.msra.mxu0 0
    %579 = vmatprep.subr.bf16.mxu0 0
    %580 = vmatpush1.bf16.msra.mxu0 0
    %581 = vmatprep.mubr.bf16.mxu0 0
    %582 = vmatmul.mubr.bf16.gmra.mrb[0].mxu0 %v547
    %v583 = vpop.f32.mrb[0].mxu0
    %v584 = vadd.f32 %v535, %v583
    %v585 = vpop.f32.mrb[0].mxu0
    %v586 = vpop.f32.mrb[0].mxu0
    %v587 = vpop.f32.mrb[0].mxu0
    %588 = vdwg.mxu0
    %v590 = vlaneseq
    %v591 = vshrl.u32 %v590, 7
    %v592 = vsub.s32 0, %v591
    %v593 = vrot.slane %v481, %v592
    %v595 = vadd.f32 %v584, %v593
    %v596 = vmax.f32 %v595, 0.0
    %v597 = vpack.c.bf16 %v596, %v596
    %v599 = vlaneseq
    %v600 = vshrl.u32 %v599, 7
    %v601 = vsub.s32 0, %v600
    %v602 = vrot.slane %v484, %v601
    %v606 = vunpack.c.l.b16 %v482
    %v607 = vunpack.c.l.b16 %v483
    %v608 = vpack.c.b16 %v607, %v606
    %v611 = vsel %vm496, %v597, 0
    %613 = vmatprep.subr.bf16.mxu0 0
    %614 = vmatpush1.bf16.msra.mxu0 %v608
    %615 = vmatprep.subr.bf16.mxu0 0
    %616 = vmatpush1.bf16.msra.mxu0 0
    %617 = vmatprep.subr.bf16.mxu0 0
    %618 = vmatpush1.bf16.msra.mxu0 0
    %619 = vmatprep.subr.bf16.mxu0 0
    %620 = vmatpush1.bf16.msra.mxu0 0
    %621 = vmatprep.subr.bf16.mxu0 0
    %622 = vmatpush1.bf16.msra.mxu0 0
    %623 = vmatprep.subr.bf16.mxu0 0
    %624 = vmatpush1.bf16.msra.mxu0 0
    %625 = vmatprep.subr.bf16.mxu0 0
    %626 = vmatpush1.bf16.msra.mxu0 0
    %627 = vmatprep.subr.bf16.mxu0 0
    %628 = vmatpush1.bf16.msra.mxu0 0
    %629 = vmatprep.subr.bf16.mxu0 0
    %630 = vmatpush1.bf16.msra.mxu0 0
    %631 = vmatprep.subr.bf16.mxu0 0
    %632 = vmatpush1.bf16.msra.mxu0 0
    %633 = vmatprep.subr.bf16.mxu0 0
    %634 = vmatpush1.bf16.msra.mxu0 0
    %635 = vmatprep.subr.bf16.mxu0 0
    %636 = vmatpush1.bf16.msra.mxu0 0
    %637 = vmatprep.subr.bf16.mxu0 0
    %638 = vmatpush1.bf16.msra.mxu0 0
    %639 = vmatprep.subr.bf16.mxu0 0
    %640 = vmatpush1.bf16.msra.mxu0 0
    %641 = vmatprep.subr.bf16.mxu0 0
    %642 = vmatpush1.bf16.msra.mxu0 0
    %643 = vmatprep.subr.bf16.mxu0 0
    %644 = vmatpush1.bf16.msra.mxu0 0
    %645 = vmatprep.mubr.bf16.mxu0 0
    %646 = vmatmul.mubr.bf16.gmra.mrb[0].mxu0 %v611
    %v647 = vpop.f32.mrb[0].mxu0
    %v648 = vadd.f32 %v602, %v647
    %v649 = vpop.f32.mrb[0].mxu0
    %v650 = vpop.f32.mrb[0].mxu0
    %v651 = vpop.f32.mrb[0].mxu0
    %652 = vdwg.mxu0
    %v653 = vmax.f32 %v648, 0.0
    %v654 = vpack.c.bf16 %v653, %v653
    %v656 = vlaneseq
    %v657 = vshrl.u32 %v656, 7
    %v658 = vsub.s32 0, %v657
    %v659 = vrot.slane %v487, %v658
    %v663 = vunpack.c.l.b16 %v485
    %v664 = vunpack.c.l.b16 %v486
    %v665 = vpack.c.b16 %v664, %v663
    %v668 = vsel %vm496, %v654, 0
    %670 = vmatprep.subr.bf16.mxu0 0
    %671 = vmatpush1.bf16.msra.mxu0 %v665
    %672 = vmatprep.subr.bf16.mxu0 0
    %673 = vmatpush1.bf16.msra.mxu0 0
    %674 = vmatprep.subr.bf16.mxu0 0
    %675 = vmatpush1.bf16.msra.mxu0 0
    %676 = vmatprep.subr.bf16.mxu0 0
    %677 = vmatpush1.bf16.msra.mxu0 0
    %678 = vmatprep.subr.bf16.mxu0 0
    %679 = vmatpush1.bf16.msra.mxu0 0
    %680 = vmatprep.subr.bf16.mxu0 0
    %681 = vmatpush1.bf16.msra.mxu0 0
    %682 = vmatprep.subr.bf16.mxu0 0
    %683 = vmatpush1.bf16.msra.mxu0 0
    %684 = vmatprep.subr.bf16.mxu0 0
    %685 = vmatpush1.bf16.msra.mxu0 0
    %686 = vmatprep.subr.bf16.mxu0 0
    %687 = vmatpush1.bf16.msra.mxu0 0
    %688 = vmatprep.subr.bf16.mxu0 0
    %689 = vmatpush1.bf16.msra.mxu0 0
    %690 = vmatprep.subr.bf16.mxu0 0
    %691 = vmatpush1.bf16.msra.mxu0 0
    %692 = vmatprep.subr.bf16.mxu0 0
    %693 = vmatpush1.bf16.msra.mxu0 0
    %694 = vmatprep.subr.bf16.mxu0 0
    %695 = vmatpush1.bf16.msra.mxu0 0
    %696 = vmatprep.subr.bf16.mxu0 0
    %697 = vmatpush1.bf16.msra.mxu0 0
    %698 = vmatprep.subr.bf16.mxu0 0
    %699 = vmatpush1.bf16.msra.mxu0 0
    %700 = vmatprep.subr.bf16.mxu0 0
    %701 = vmatpush1.bf16.msra.mxu0 0
    %702 = vmatprep.mubr.bf16.mxu0 0
    %703 = vmatmul.mubr.bf16.gmra.mrb[0].mxu0 %v668
    %v704 = vpop.f32.mrb[0].mxu0
    %v705 = vadd.f32 %v659, %v704
    %v706 = vpop.f32.mrb[0].mxu0
    %v707 = vpop.f32.mrb[0].mxu0
    %v708 = vpop.f32.mrb[0].mxu0
    %709 = vdwg.mxu0
    %710 = vst [vmem:[#allocation23] sm:$0x3] %v705
    // Predicated region
    $region122: #{semantics_color_forward.1} parent=1 // pred_check
      _
    $region123: #{semantics_color_forward.1} parent=1 // pred_check_branch
      %712 = sbr.rel (0) target = $region125
    $region124: #{semantics_color_forward.1} parent=1 // pred_region
      %s714 = ssub.s32 128, 128
      %715 = vsyncadd [#allocation4], %s714
      %s717 = sshll.u32 [#allocation22], 4
      %s718 = int_to_ptr.vmem [resolvable:$true] %s717
      %720 = dma.vmem_to_hbm [thread:$0]  %s718, 128, %s18, [#allocation4]
    $region125: #{semantics_color_forward.1} parent=1 // pred_fallthru
      _
    // Predicated region
    $region126: #{semantics_color_forward.1} parent=1 // pred_check
      _
    $region127: #{semantics_color_forward.1} parent=1 // pred_check_branch
      %722 = sbr.rel (0) target = $region129
    $region128: #{semantics_color_forward.1} parent=1 // pred_region
      %s724 = ssub.s32 32, 32
      %725 = vsyncadd [#allocation24], %s724
      %s727 = sshll.u32 [#allocation23], 4
      %s728 = int_to_ptr.vmem [resolvable:$true] %s727
      %730 = dma.vmem_to_hbm [thread:$0]  %s728, 32, %s19, [#allocation24]
    $region129: #{semantics_color_forward.1} parent=1 // pred_fallthru
      _
    // Predicated region
    $region130: #{semantics_color_forward.1} parent=1 // pred_check
      _
    $region131: #{semantics_color_forward.1} parent=1 // pred_check_branch
      %732 = sbr.rel (0) target = $region133
    $region132: #{semantics_color_forward.1} parent=1 // pred_region
      %733 = dma.done [#allocation4], 128
    $region133: #{semantics_color_forward.1} parent=1 // pred_fallthru
      _
    // Predicated region
    $region134: #{semantics_color_forward.1} parent=1 // pred_check
      _
    $region135: #{semantics_color_forward.1} parent=1 // pred_check_branch
      %735 = sbr.rel (0) target = $region137
    $region136: #{semantics_color_forward.1} parent=1 // pred_region
      %736 = dma.done [#allocation24], 32
    $region137: #{semantics_color_forward.1} parent=1 // pred_fallthru
      _
    %737 = vsyncpa [#allocation3], 1
    %738 = vsyncpa [#allocation6], 1
    %739 = vsyncpa [#allocation9], 1
    %740 = vsyncpa [#allocation12], 1
    %741 = vsyncpa [#allocation15], 1
    %742 = vsyncpa [#allocation18], 1
    %743 = vsyncpa [#allocation21], 1
    %744 = vsyncpa [#allocation4], 1
    %745 = vsyncpa [#allocation24], 1

</llo_original>
